<compile_context>
chip_gen: v7x
topology: tpu7x:2x2x1
jax: 0.10.0
libtpu: 0.0.40
codegen_flags: <defaults>
</compile_context>

<pallas_src>
import functools

import jax
import jax.numpy as jnp
from jax.experimental import pallas as pl
from jax.experimental.pallas import tpu as pltpu


# --------------------------------- kernel ---------------------------------
def resnet_block_kernel(x_ref, halo_ref, w1_ref, b1_ref, wfin_ref, bfin_ref, o_ref,
                        *, dilation):
    """One (batch, T-tile) grid step. NCW layout: x_ref/o_ref blocks are (1, C, T_tile) bf16/f32."""
    slope = 0.2
    d = dilation
    C, t_tile = x_ref.shape[1], x_ref.shape[2]

    x_bf = x_ref[0]                                    # (C, t_tile) bf16 (shortcut operand)
    body = x_bf.astype(jnp.float32)
    hb = jnp.where(body > 0, body, slope * body)       # LeakyReLU in f32 (v5e: no bf16 VALU)

    # lane-padded halos: rows [0,C) = left halo in lanes [0,d), rows [C,2C) = right halo
    # in lanes [128-d, 128); zeros elsewhere (masked out below).
    halo = halo_ref[0, 0].astype(jnp.float32)          # (2C, 128)
    hh = jnp.where(halo > 0, halo, slope * halo)
    h_left, h_right = hh[:C], hh[C:]

    lane = jax.lax.broadcasted_iota(jnp.int32, (C, 128), 1)

    # tap0 = slab[:, 0:T]: body shifted right by d (XLU roll), left halo spliced into
    # lanes [0, d) of the first 128-lane block only (128-aligned concat afterwards).
    roll_r = pltpu.roll(hb, d % t_tile, 1)
    head = jnp.where(lane < d, h_left, roll_r[:, :128]).astype(jnp.bfloat16)
    if t_tile > 128:
        tap0 = jnp.concatenate([head, roll_r[:, 128:].astype(jnp.bfloat16)], axis=1)
    else:
        tap0 = head

    # tap2 = slab[:, 2d:2d+T]: body shifted left by d, right halo spliced into the last
    # d lanes of the final 128-lane block.
    roll_l = pltpu.roll(hb, (t_tile - d) % t_tile, 1)
    tail = jnp.where(lane >= 128 - d, h_right,
                     roll_l[:, t_tile - 128:]).astype(jnp.bfloat16)
    if t_tile > 128:
        tap2 = jnp.concatenate([roll_l[:, :t_tile - 128].astype(jnp.bfloat16), tail], axis=1)
    else:
        tap2 = tail

    # Dilated k=3 conv as ONE (C,3C)x(3C,T) bf16 matmul with f32 accumulation.
    hcat = jnp.concatenate([tap0, hb.astype(jnp.bfloat16), tap2], axis=0)   # (3C, t_tile)
    conv = jnp.dot(w1_ref[...], hcat,
                   preferred_element_type=jnp.float32) + b1_ref[...]        # (C, t_tile) f32

    h2 = jnp.where(conv > 0, conv, slope * conv).astype(jnp.bfloat16)

    # Fused shortcut(1x1) + final 1x1: [Wsc | W2] @ [x ; h2], bias = bsc + b2.
    fused_in = jnp.concatenate([x_bf, h2], axis=0)                          # (2C, t_tile)
    out = jnp.dot(wfin_ref[...], fused_in,
                  preferred_element_type=jnp.float32) + bfin_ref[...]
    o_ref[0] = out.astype(o_ref.dtype)


# ------------------------------- tiling helpers -------------------------------
def _vmem_cap_bytes():
    """~75% of physical VMEM (≈48 MiB on v7x, ≈96 MiB on v5e/v6e)."""
    try:
        phys = int(pltpu.get_tpu_info().vmem_capacity_bytes)
    except Exception:
        phys = 64 * 1024 * 1024   # conservative fallback
    return (phys * 3) // 4


def _pick_t_tile(T_pad, C, vmem_cap_bytes, batch):
    """Largest 128-multiple divisor of T_pad that fits the VMEM budget and keeps
    >=4 grid steps (both v7x TensorCores fed) whenever the problem allows it."""
    budget = vmem_cap_bytes // 2
    per_t = 40 * C                 # rough bytes per time-sample across buffers + temps
    max_tile = max(128, min(4096, (budget // per_t) // 128 * 128))
    max_tile = min(max_tile, T_pad)
    want_steps = min(4, batch * (T_pad // 128))
    for k in range(max_tile // 128, 0, -1):
        cand = 128 * k
        if T_pad % cand == 0 and batch * (T_pad // cand) >= want_steps:
            return cand
    return 128


# --------------------------------- wrapper ---------------------------------
def resnet_block(x_ncw, params, dilation):
    """x_ncw: (B, C, T) float32 (PyTorch NCW). Returns (B, C, T) float32."""
    wsc, bsc, w1, b1, w2, b2 = params   # weight-norm already resolved to effective weights
    B, C, T = x_ncw.shape
    d = int(dilation)
    assert 1 <= d < T, "ReflectionPad1d requires 1 <= dilation < T"
    assert d <= 128, "halo splice assumes dilation <= 128 (one lane block)"

    # --- pad T to a 128 multiple; tail holds the right-edge reflection so outputs at
    #     valid positions stay exact; padded outputs are sliced off. ---
    T_pad = ((T + 127) // 128) * 128
    if T_pad != T:
        tail_idx = jnp.clip(2 * (T - 1) - jnp.arange(T, T_pad), 0, T - 1)
        x_pad = jnp.concatenate([x_ncw, jnp.take(x_ncw, tail_idx, axis=2)], axis=2)
    else:
        x_pad = x_ncw

    cap = _vmem_cap_bytes()
    t_tile = _pick_t_tile(T_pad, C, cap, B)
    n_t = T_pad // t_tile

    # --- lane-padded per-tile halos (B, n_t, 2C, 128) bf16:
    #     rows [0,C): left halo in lanes [0,d);  rows [C,2C): right halo in lanes [128-d,128).
    #     Reflection applied only where a tile touches the true sequence ends. ---
    j = jnp.arange(n_t)
    left = j[:, None] * t_tile - d + jnp.arange(d)[None, :]        # (n_t, d)
    right = (j[:, None] + 1) * t_tile + jnp.arange(d)[None, :]     # (n_t, d)

    def _fix(idx):
        idx = jnp.where(idx < 0, -idx, idx)                        # reflect left edge
        idx = jnp.where(idx >= T_pad, 2 * (T - 1) - idx, idx)      # reflect true right edge
        return jnp.clip(idx, 0, T_pad - 1)                         # clamp don't-care slots

    left, right = _fix(left), _fix(right)
    lg = jnp.take(x_pad, left.reshape(-1), axis=2).reshape(B, C, n_t, d).transpose(0, 2, 1, 3)
    rg = jnp.take(x_pad, right.reshape(-1), axis=2).reshape(B, C, n_t, d).transpose(0, 2, 1, 3)
    lg = jnp.pad(lg, ((0, 0), (0, 0), (0, 0), (0, 128 - d)))
    rg = jnp.pad(rg, ((0, 0), (0, 0), (0, 0), (128 - d, 0)))
    halos = jnp.concatenate([lg, rg], axis=2).astype(jnp.bfloat16)  # (B, n_t, 2C, 128)

    # --- bf16 weight repack for the fused NCW matmuls (biases stay f32) ---
    w1cat = jnp.transpose(w1, (0, 2, 1)).reshape(C, 3 * C).astype(jnp.bfloat16)   # [co, k*C+ci]
    wfin = jnp.concatenate([wsc[:, :, 0], w2[:, :, 0]], axis=1).astype(jnp.bfloat16)  # [Wsc|W2]
    b1_r = b1.reshape(C, 1).astype(jnp.float32)
    bfin_r = (bsc + b2).reshape(C, 1).astype(jnp.float32)
    x_bf = x_pad.astype(jnp.bfloat16)

    kernel = functools.partial(resnet_block_kernel, dilation=d)

    # scoped-VMEM budget: double buffers + in-kernel temporaries, clamped to ~75% physical
    bf2, f4 = 2, 4
    tile = C * t_tile
    est = (2 * tile * bf2                   # x double buffer (bf16)
           + 2 * tile * f4                  # out double buffer (f32)
           + 2 * 2 * C * 128 * bf2          # halo double buffer
           + 2 * 5 * C * C * bf2            # w1cat + wfin (double buffered)
           + 4 * 2 * C * f4                 # biases
           + tile * (3 * f4 + 4 * bf2))     # leaky/rolls (f32) + taps/hcat/h2/fused (bf16)
    vmem_limit = int(min(cap, max(32 * 1024 * 1024, 2 * est)))

    out = pl.pallas_call(
        kernel,
        out_shape=jax.ShapeDtypeStruct((B, C, T_pad), x_ncw.dtype),
        grid_spec=pltpu.PrefetchScalarGridSpec(
            num_scalar_prefetch=0,
            grid=(B, n_t),
            in_specs=[
                pl.BlockSpec((1, C, t_tile), lambda b, j: (b, 0, j)),        # x tile (bf16)
                pl.BlockSpec((1, 1, 2 * C, 128), lambda b, j: (b, j, 0, 0)), # lane-padded halo
                pl.BlockSpec((C, 3 * C), lambda b, j: (0, 0)),               # fused k=3 W (bf16)
                pl.BlockSpec((C, 1), lambda b, j: (0, 0)),                   # k=3 bias (f32)
                pl.BlockSpec((C, 2 * C), lambda b, j: (0, 0)),               # [Wsc | W2] (bf16)
                pl.BlockSpec((C, 1), lambda b, j: (0, 0)),                   # bsc + b2 (f32)
            ],
            out_specs=pl.BlockSpec((1, C, t_tile), lambda b, j: (b, 0, j)),
        ),
        compiler_params=pltpu.CompilerParams(
            dimension_semantics=("parallel", "parallel"),
            vmem_limit_bytes=vmem_limit,
        ),
    )(x_bf, halos, w1cat, b1_r, wfin, bfin_r)

    return out if T_pad == T else out[:, :, :T]


# ---------------- parameter construction (weight_norm semantics) ----------------
def make_wn_conv1d(key, c_out, c_in, k):
    """Effective weight_norm Conv1d weight (c_out, c_in, k) and bias (c_out,)."""
    kv, kg, kb = jax.random.split(key, 3)
    v = jax.random.normal(kv, (c_out, c_in, k), jnp.float32) * 0.1
    g = 0.5 + jax.random.uniform(kg, (c_out, 1, 1), jnp.float32)
    b = jax.random.normal(kb, (c_out,), jnp.float32) * 0.1
    norm = jnp.sqrt(jnp.sum(v * v, axis=(1, 2), keepdims=True))
    w = g * v / norm   # weight_norm(dim=0): per-output-channel normalization
    return w, b


# ---------------- pure-JAX references (mirror the PyTorch module) ----------------
def _conv1d(inp, w, b, rhs_dil=1):
    out = jax.lax.conv_general_dilated(
        inp, w, window_strides=(1,), padding=((0, 0),),
        rhs_dilation=(rhs_dil,), dimension_numbers=("NCH", "OIH", "NCH"))
    return out + b[None, :, None]


def reference(x_ncw, params, dilation):
    """Full-f32 reference (exact module semantics)."""
    wsc, bsc, w1, b1, w2, b2 = params
    d = dilation
    lrelu = lambda v: jnp.where(v > 0, v, 0.2 * v)
    sc = _conv1d(x_ncw, wsc, bsc)
    h = lrelu(x_ncw)
    h = jnp.pad(h, ((0, 0), (0, 0), (d, d)), mode="reflect")
    h = _conv1d(h, w1, b1, rhs_dil=d)
    h = lrelu(h)
    h = _conv1d(h, w2, b2)
    return sc + h


def reference_bf16(x_ncw, params, dilation):
    """Reference with the same bf16 data-movement quantization points as the kernel
    (f32 accumulation everywhere) — allows a tight numerical check."""
    wsc, bsc, w1, b1, w2, b2 = params
    d = dilation
    q = lambda a: a.astype(jnp.bfloat16).astype(jnp.float32)
    lrelu = lambda v: jnp.where(v > 0, v, 0.2 * v)
    xq, w1q, w2q, wscq = q(x_ncw), q(w1), q(w2), q(wsc)
    sc = _conv1d(xq, wscq, bsc)
    h = q(lrelu(xq))
    h = jnp.pad(h, ((0, 0), (0, 0), (d, d)), mode="reflect")
    h = _conv1d(h, w1q, b1, rhs_dil=d)
    h = q(lrelu(h))
    h = _conv1d(h, w2q, b2)
    return sc + h


if __name__ == "__main__":
    def run_case(B, C, T, dilation, key):
        kx, k1, k2, k3 = jax.random.split(key, 4)
        x = jax.random.normal(kx, (B, C, T), jnp.float32)
        w1, b1 = make_wn_conv1d(k1, C, C, 3)    # block conv (k=3, dilated)
        w2, b2 = make_wn_conv1d(k2, C, C, 1)    # block conv (k=1)
        wsc, bsc = make_wn_conv1d(k3, C, C, 1)  # shortcut conv (k=1)
        params = (wsc, bsc, w1, b1, w2, b2)

        out = jax.block_until_ready(resnet_block(x, params, dilation))
        assert out.shape == (B, C, T)

        # tight check against a bf16-faithful reference (same quantization points)
        ref_q = reference_bf16(x, params, dilation)
        assert jnp.allclose(out, ref_q, atol=1e-2, rtol=1e-2), (
            f"mismatch vs bf16-faithful reference for B={B} C={C} T={T} d={dilation}")

        # sanity check against the full-f32 module reference (bf16 quantization error only)
        ref_f = reference(x, params, dilation)
        max_err = float(jnp.max(jnp.abs(out - ref_f)))
        bound = 0.05 * float(jnp.max(jnp.abs(ref_f))) + 0.05
        assert max_err < bound, (
            f"bf16 drift too large vs f32 reference: {max_err} (bound {bound}) "
            f"for B={B} C={C} T={T} d={dilation}")

    key = jax.random.PRNGKey(0)
    k_small, k_tiled, k_odd = jax.random.split(key, 3)

    # small spec-sized shape: T padded 16 -> 128, reflection at both true ends
    run_case(B=2, C=32, T=16, dilation=3, key=k_small)
    # tiled path: lane-dense 1024-wide tiles, interior halos, >=4 grid steps
    run_case(B=1, C=32, T=4096, dilation=1, key=k_tiled)
    # T not a multiple of 128: reflected tail fill + larger dilation
    run_case(B=2, C=32, T=300, dilation=9, key=k_odd)

    print("KERNEL_OK")
</pallas_src>

<mosaic_0001>
module attributes {stable_mosaic.version = 11 : i64} {
  func.func @resnet_block_kernel(%arg0: i32, %arg1: i32, %arg2: memref<1x32x128xbf16, #tpu.memory_space<vmem>>, %arg3: memref<1x1x64x128xbf16, #tpu.memory_space<vmem>>, %arg4: memref<32x96xbf16, #tpu.memory_space<vmem>>, %arg5: memref<32x1xf32, #tpu.memory_space<vmem>>, %arg6: memref<32x64xbf16, #tpu.memory_space<vmem>>, %arg7: memref<32x1xf32, #tpu.memory_space<vmem>>, %arg8: memref<1x32x128xf32, #tpu.memory_space<vmem>>) attributes {dimension_semantics = [#tpu.dimension_semantics<parallel>, #tpu.dimension_semantics<parallel>], iteration_bounds = array<i64: 2, 1>, scalar_prefetch = 0 : i64, scratch_operands = 0 : i64, tpu.core_type = #tpu.core_type<tc>, window_params = [{transform_indices = @transform_0, window_bounds = array<i64: 1, 32, 128>}, {transform_indices = @transform_1, window_bounds = array<i64: 1, 1, 64, 128>}, {pipeline_mode = #tpu.pipeline_mode<synchronous>, transform_indices = @transform_2, window_bounds = array<i64: 32, 96>}, {pipeline_mode = #tpu.pipeline_mode<synchronous>, transform_indices = @transform_3, window_bounds = array<i64: 32, 1>}, {pipeline_mode = #tpu.pipeline_mode<synchronous>, transform_indices = @transform_4, window_bounds = array<i64: 32, 64>}, {pipeline_mode = #tpu.pipeline_mode<synchronous>, transform_indices = @transform_5, window_bounds = array<i64: 32, 1>}, {transform_indices = @transform_6, window_bounds = array<i64: 1, 32, 128>}]} {
    %c0 = arith.constant 0 : index
    %c0_0 = arith.constant 0 : index
    %c0_1 = arith.constant 0 : index
    %0 = vector.load %arg2[%c0, %c0_0, %c0_1] : memref<1x32x128xbf16, #tpu.memory_space<vmem>>, vector<1x32x128xbf16>
    %1 = vector.shape_cast %0 : vector<1x32x128xbf16> to vector<32x128xbf16>
    %2 = arith.extf %1 : vector<32x128xbf16> to vector<32x128xf32>
    %cst = arith.constant 0.000000e+00 : f32
    %3 = vector.broadcast %cst : f32 to vector<32x128xf32>
    %4 = arith.cmpf ogt, %2, %3 : vector<32x128xf32>
    %cst_2 = arith.constant 2.000000e-01 : f32
    %5 = vector.broadcast %cst_2 : f32 to vector<32x128xf32>
    %6 = arith.mulf %5, %2 : vector<32x128xf32>
    %7 = arith.select %4, %2, %6 : vector<32x128xi1>, vector<32x128xf32>
    %c0_3 = arith.constant 0 : index
    %c0_4 = arith.constant 0 : index
    %c0_5 = arith.constant 0 : index
    %c0_6 = arith.constant 0 : index
    %8 = vector.load %arg3[%c0_3, %c0_4, %c0_5, %c0_6] : memref<1x1x64x128xbf16, #tpu.memory_space<vmem>>, vector<1x1x64x128xbf16>
    %9 = vector.shape_cast %8 : vector<1x1x64x128xbf16> to vector<64x128xbf16>
    %10 = arith.extf %9 : vector<64x128xbf16> to vector<64x128xf32>
    %cst_7 = arith.constant 0.000000e+00 : f32
    %11 = vector.broadcast %cst_7 : f32 to vector<64x128xf32>
    %12 = arith.cmpf ogt, %10, %11 : vector<64x128xf32>
    %cst_8 = arith.constant 2.000000e-01 : f32
    %13 = vector.broadcast %cst_8 : f32 to vector<64x128xf32>
    %14 = arith.mulf %13, %10 : vector<64x128xf32>
    %15 = arith.select %12, %10, %14 : vector<64x128xi1>, vector<64x128xf32>
    %16 = vector.extract_strided_slice %15 {offsets = [0, 0], sizes = [32, 128], strides = [1, 1]} : vector<64x128xf32> to vector<32x128xf32>
    %17 = vector.extract_strided_slice %15 {offsets = [32, 0], sizes = [32, 128], strides = [1, 1]} : vector<64x128xf32> to vector<32x128xf32>
    %18 = tpu.iota {dimensions = array<i32: 1>} : vector<32x128xi32>
    %c3_i32 = arith.constant 3 : i32
    %19 = tpu.dynamic_rotate %7 by %c3_i32 dim 1 : vector<32x128xf32>, i32 -> vector<32x128xf32>
    %c3_i32_9 = arith.constant 3 : i32
    %20 = vector.broadcast %c3_i32_9 : i32 to vector<32x128xi32>
    %21 = arith.cmpi slt, %18, %20 : vector<32x128xi32>
    %22 = arith.select %21, %16, %19 : vector<32x128xi1>, vector<32x128xf32>
    %23 = arith.truncf %22 : vector<32x128xf32> to vector<32x128xbf16>
    %c125_i32 = arith.constant 125 : i32
    %24 = tpu.dynamic_rotate %7 by %c125_i32 dim 1 : vector<32x128xf32>, i32 -> vector<32x128xf32>
    %c125_i32_10 = arith.constant 125 : i32
    %25 = vector.broadcast %c125_i32_10 : i32 to vector<32x128xi32>
    %26 = arith.cmpi sge, %18, %25 : vector<32x128xi32>
    %27 = arith.select %26, %17, %24 : vector<32x128xi1>, vector<32x128xf32>
    %28 = arith.truncf %27 : vector<32x128xf32> to vector<32x128xbf16>
    %29 = arith.truncf %7 : vector<32x128xf32> to vector<32x128xbf16>
    %30 = tpu.concatenate %23, %29, %28 in 0 : vector<32x128xbf16>, vector<32x128xbf16>, vector<32x128xbf16> -> vector<96x128xbf16>
    %c0_11 = arith.constant 0 : index
    %c0_12 = arith.constant 0 : index
    %31 = vector.load %arg4[%c0_11, %c0_12] : memref<32x96xbf16, #tpu.memory_space<vmem>>, vector<32x96xbf16>
    %cst_13 = arith.constant dense<0.000000e+00> : vector<32x128xf32>
    %32 = tpu.matmul %31, %30, %cst_13 {dimension_numbers = #tpu.dot_dimension_numbers<[1], [0], [0], [1], [0, 0, 1, 1], [], []>} : vector<32x96xbf16>, vector<96x128xbf16>, vector<32x128xf32> -> vector<32x128xf32>
    %c0_14 = arith.constant 0 : index
    %c0_15 = arith.constant 0 : index
    %33 = vector.load %arg5[%c0_14, %c0_15] : memref<32x1xf32, #tpu.memory_space<vmem>>, vector<32x1xf32>
    %34 = vector.broadcast %33 : vector<32x1xf32> to vector<32x128xf32>
    %35 = arith.addf %32, %34 : vector<32x128xf32>
    %cst_16 = arith.constant 0.000000e+00 : f32
    %36 = vector.broadcast %cst_16 : f32 to vector<32x128xf32>
    %37 = arith.cmpf ogt, %35, %36 : vector<32x128xf32>
    %cst_17 = arith.constant 2.000000e-01 : f32
    %38 = vector.broadcast %cst_17 : f32 to vector<32x128xf32>
    %39 = arith.mulf %38, %35 : vector<32x128xf32>
    %40 = arith.select %37, %35, %39 : vector<32x128xi1>, vector<32x128xf32>
    %41 = arith.truncf %40 : vector<32x128xf32> to vector<32x128xbf16>
    %42 = tpu.concatenate %1, %41 in 0 : vector<32x128xbf16>, vector<32x128xbf16> -> vector<64x128xbf16>
    %c0_18 = arith.constant 0 : index
    %c0_19 = arith.constant 0 : index
    %43 = vector.load %arg6[%c0_18, %c0_19] : memref<32x64xbf16, #tpu.memory_space<vmem>>, vector<32x64xbf16>
    %cst_20 = arith.constant dense<0.000000e+00> : vector<32x128xf32>
    %44 = tpu.matmul %43, %42, %cst_20 {dimension_numbers = #tpu.dot_dimension_numbers<[1], [0], [0], [1], [0, 0, 1, 1], [], []>} : vector<32x64xbf16>, vector<64x128xbf16>, vector<32x128xf32> -> vector<32x128xf32>
    %c0_21 = arith.constant 0 : index
    %c0_22 = arith.constant 0 : index
    %45 = vector.load %arg7[%c0_21, %c0_22] : memref<32x1xf32, #tpu.memory_space<vmem>>, vector<32x1xf32>
    %46 = vector.broadcast %45 : vector<32x1xf32> to vector<32x128xf32>
    %47 = arith.addf %44, %46 : vector<32x128xf32>
    %c0_23 = arith.constant 0 : index
    %c0_24 = arith.constant 0 : index
    %c0_25 = arith.constant 0 : index
    %48 = vector.load %arg8[%c0_23, %c0_24, %c0_25] : memref<1x32x128xf32, #tpu.memory_space<vmem>>, vector<1x32x128xf32>
    %49 = vector.shape_cast %48 : vector<1x32x128xf32> to vector<32x128xf32>
    %50 = vector.shape_cast %47 : vector<32x128xf32> to vector<1x32x128xf32>
    tpu.vector_store %arg8[%c0_23, %c0_24, %c0_25], %50 {strides = array<i32>} : memref<1x32x128xf32, #tpu.memory_space<vmem>>, vector<1x32x128xf32>,
    return
  }
  func.func @transform_0(%arg0: i32, %arg1: i32) -> (i32, i32, i32) {
    %c0_i32 = arith.constant 0 : i32
    %c0_i32_0 = arith.constant 0 : i32
    return %arg0, %c0_i32, %arg1 : i32, i32, i32
  }
  func.func @transform_1(%arg0: i32, %arg1: i32) -> (i32, i32, i32, i32) {
    %c0_i32 = arith.constant 0 : i32
    %c0_i32_0 = arith.constant 0 : i32
    %c0_i32_1 = arith.constant 0 : i32
    return %arg0, %arg1, %c0_i32, %c0_i32_0 : i32, i32, i32, i32
  }
  func.func @transform_2(%arg0: i32, %arg1: i32) -> (i32, i32) {
    %c0_i32 = arith.constant 0 : i32
    %c0_i32_0 = arith.constant 0 : i32
    %c0_i32_1 = arith.constant 0 : i32
    return %c0_i32, %c0_i32_0 : i32, i32
  }
  func.func @transform_3(%arg0: i32, %arg1: i32) -> (i32, i32) {
    %c0_i32 = arith.constant 0 : i32
    %c0_i32_0 = arith.constant 0 : i32
    %c0_i32_1 = arith.constant 0 : i32
    return %c0_i32, %c0_i32_0 : i32, i32
  }
  func.func @transform_4(%arg0: i32, %arg1: i32) -> (i32, i32) {
    %c0_i32 = arith.constant 0 : i32
    %c0_i32_0 = arith.constant 0 : i32
    %c0_i32_1 = arith.constant 0 : i32
    return %c0_i32, %c0_i32_0 : i32, i32
  }
  func.func @transform_5(%arg0: i32, %arg1: i32) -> (i32, i32) {
    %c0_i32 = arith.constant 0 : i32
    %c0_i32_0 = arith.constant 0 : i32
    %c0_i32_1 = arith.constant 0 : i32
    return %c0_i32, %c0_i32_0 : i32, i32
  }
  func.func @transform_6(%arg0: i32, %arg1: i32) -> (i32, i32, i32) {
    %c0_i32 = arith.constant 0 : i32
    %c0_i32_0 = arith.constant 0 : i32
    return %arg0, %c0_i32, %arg1 : i32, i32, i32
  }
}

</mosaic_0001>

<llo_original>
// kernel: tpu_custom_call.1
$region0: #{tpu_custom_call.1}
  #allocation0 [shape = 'u32[]', space=smem, size = 0x4, offset = 0x4, fixed_abs, tag = 'smem constant byte address 0x4 - core index']
  #allocation1 [shape = 'u32[144,128]{1,0:T(1,128)}', space=vmem, size = 0x12000, scoped, tag = 'internal scratch']
  %s0 = inlined_call_operand.hbm [shape: bf16[2,32,128], index: 0, kind: input, shape index: {}]
  %s1 = inlined_call_operand.vmem [shape: bf16[2,1,64,128], index: 1, kind: input, shape index: {}]
  %s2 = inlined_call_operand.hbm [shape: bf16[32,96], index: 2, kind: input, shape index: {}]
  %s3 = inlined_call_operand.vmem [shape: f32[32,1], index: 3, kind: input, shape index: {}]
  %s4 = inlined_call_operand.vmem [shape: bf16[32,64], index: 4, kind: input, shape index: {}]
  %s5 = inlined_call_operand.vmem [shape: f32[32,1], index: 5, kind: input, shape index: {}]
  %s6 = inlined_call_operand.hbm [shape: f32[2,32,128], index: 6, kind: output, shape index: {}]
  %s7 = sld [smem:[#allocation0]]
  $region65: #{tpu_custom_call.1} parent=0
    _
  %s9 = ssub.s32 1, %s7
  %s10 = scalar_select 0, %s9, %s7
  $region1: #{tpu_custom_call.1} parent=0
    #allocation2 [shape = 'u8[16384]{0}', space=vmem, size = 0x4000, scoped, tag = 'input window, operand 0']
    #allocation3 [shape = 's32[2]{0}', space=sflag, size = 0x8, scoped, tag = 'scoped memory for tpu_custom_call.1']
    #allocation4 [shape = 's32[2]{0}', space=sflag, size = 0x8, scoped, tag = 'scoped memory for tpu_custom_call.1']
    #allocation5 [shape = 'u8[8192]{0}', space=vmem, size = 0x2000, scoped, tag = 'input window, operand 2, single buffered']
    #allocation6 [shape = 's32[1]{0}', space=sflag, size = 0x4, scoped, tag = 'scoped memory for tpu_custom_call.1']
    #allocation7 [shape = 'u8[32768]{0}', space=vmem, size = 0x8000, scoped, tag = 'output window, operand 0']
    %11 = vsyncpa [#allocation3], 0
    %s12 = scalar_lea.sflag [#allocation3], 1
    %13 = vsyncpa %s12, 0
    %14 = vsyncpa [#allocation6], 0
    %15 = vsyncpa [#allocation4], 0
    %s16 = scalar_lea.sflag [#allocation4], 1
    %17 = vsyncpa %s16, 0
    loop: start=0, step=1, limit=4
    $region2: #{tpu_custom_call.1} parent=1 // loop_pre_header
      _
    $region3: #{tpu_custom_call.1} parent=1 // loop_header
      %s19 = sphi 0, %s23
      %p20 = scmp.ge.s32.totalorder %s19, 4
      %s26 = sphi 0, %s38
      %s27 = sphi 0, %s34
      %s28 = sphi 0, %s26
      %s29 = sphi 0, %s27
      %s30 = sphi 0, %s28
      %s31 = sphi 0, %s29
      %s43 = sphi 0, %s45
      %s46 = sphi 0, %s43
      %s47 = sphi 0, %s46
      %s63 = sphi 0, %s47
      %s71 = sphi 0, %s73
      %s74 = sphi 0, %s71
      %s75 = sphi 0, %s74
      %s91 = sphi 0, %s75
      %s95 = sphi 0, %s95
      %s97 = sphi 0, %s95
      %s98 = sphi 0, %s97
      %s112 = sphi 0, %s98
      %s116 = sphi 0, %s116
      %s118 = sphi 0, %s116
      %s119 = sphi 0, %s118
      %s133 = sphi 0, %s119
      %s137 = sphi 0, %s137
      %s139 = sphi 0, %s137
      %s140 = sphi 0, %s139
      %s154 = sphi 0, %s140
      %s158 = sphi 0, %s158
      %s160 = sphi 0, %s158
      %s161 = sphi 0, %s160
      %s175 = sphi 0, %s161
      %s183 = sphi 0, %s185
      %s186 = sphi 0, %s183
      %s187 = sphi 0, %s186
      %s203 = sphi 0, %s187
    $region4: #{tpu_custom_call.1} parent=1 // loop_header_branch
      %22 = sbr.rel (%p20) target = $region8
    $region5: #{tpu_custom_call.1} parent=1 // loop_body
      %s24 = ssub.s32 %s19, 1
      %s25 = ssub.s32 %s19, 2
      %s32 = sadd.s32 1, %s27
      %p33 = scmp.ge.s32.totalorder %s32, 1
      %s34 = scalar_select %p33, 0, %s32
      %s35 = sadd.s32 1, %s26
      %s36 = scalar_select %p33, %s35, %s26
      %p37 = scmp.ge.s32.totalorder %s36, 2
      %s38 = scalar_select %p37, 0, %s36
      %s39 = ssub.s32 %s26, %s38
      %s40 = ssub.s32 %s27, %s34
      %s41 = sor.u32 %s39, %s40
      %p42 = scmp.eq.s32.totalorder %s41, 0
      %s44 = sadd.s32 %s43, 1
      %s45 = scalar_select %p42, %s43, %s44
      %p48 = pneg %p42
      %p49 = scmp.eq.s32.totalorder %s19, 1
      %p50 = por %p48, %p49
      %p51 = scmp.ne.s32.totalorder %s43, %s46
      %p52 = scmp.eq.s32.totalorder %s19, 0
      %p53 = por %p51, %p52
      %p54 = scmp.ne.s32.totalorder %s43, %s46
      %p55 = scmp.eq.s32.totalorder %s24, 1
      %p56 = por %p54, %p55
      %p57 = scmp.ne.s32.totalorder %s46, %s47
      %p58 = scmp.eq.s32.totalorder %s24, 0
      %p59 = por %p57, %p58
      %p60 = scmp.ne.s32.totalorder %s46, %s47
      %p61 = scmp.eq.s32.totalorder %s25, 1
      %p62 = por %p60, %p61
      %p64 = scmp.ne.s32.totalorder %s47, %s63
      %p65 = scmp.eq.s32.totalorder %s25, 0
      %p66 = por %p64, %p65
      %s67 = ssub.s32 %s26, %s38
      %s68 = ssub.s32 %s27, %s34
      %s69 = sor.u32 %s67, %s68
      %p70 = scmp.eq.s32.totalorder %s69, 0
      %s72 = sadd.s32 %s71, 1
      %s73 = scalar_select %p70, %s71, %s72
      %p76 = pneg %p70
      %p77 = scmp.eq.s32.totalorder %s19, 1
      %p78 = por %p76, %p77
      %p79 = scmp.ne.s32.totalorder %s71, %s74
      %p80 = scmp.eq.s32.totalorder %s19, 0
      %p81 = por %p79, %p80
      %p82 = scmp.ne.s32.totalorder %s71, %s74
      %p83 = scmp.eq.s32.totalorder %s24, 1
      %p84 = por %p82, %p83
      %p85 = scmp.ne.s32.totalorder %s74, %s75
      %p86 = scmp.eq.s32.totalorder %s24, 0
      %p87 = por %p85, %p86
      %p88 = scmp.ne.s32.totalorder %s74, %s75
      %p89 = scmp.eq.s32.totalorder %s25, 1
      %p90 = por %p88, %p89
      %p92 = scmp.ne.s32.totalorder %s75, %s91
      %p93 = scmp.eq.s32.totalorder %s25, 0
      %p94 = por %p92, %p93
      %s96 = sadd.s32 %s95, 1
      %p99 = scmp.eq.s32.totalorder %s19, 1
      %p100 = scmp.ne.s32.totalorder %s95, %s97
      %p101 = scmp.eq.s32.totalorder %s19, 0
      %p102 = por %p100, %p101
      %p103 = scmp.ne.s32.totalorder %s95, %s97
      %p104 = scmp.eq.s32.totalorder %s24, 1
      %p105 = por %p103, %p104
      %p106 = scmp.ne.s32.totalorder %s97, %s98
      %p107 = scmp.eq.s32.totalorder %s24, 0
      %p108 = por %p106, %p107
      %p109 = scmp.ne.s32.totalorder %s97, %s98
      %p110 = scmp.eq.s32.totalorder %s25, 1
      %p111 = por %p109, %p110
      %p113 = scmp.ne.s32.totalorder %s98, %s112
      %p114 = scmp.eq.s32.totalorder %s25, 0
      %p115 = por %p113, %p114
      %s117 = sadd.s32 %s116, 1
      %p120 = scmp.eq.s32.totalorder %s19, 1
      %p121 = scmp.ne.s32.totalorder %s116, %s118
      %p122 = scmp.eq.s32.totalorder %s19, 0
      %p123 = por %p121, %p122
      %p124 = scmp.ne.s32.totalorder %s116, %s118
      %p125 = scmp.eq.s32.totalorder %s24, 1
      %p126 = por %p124, %p125
      %p127 = scmp.ne.s32.totalorder %s118, %s119
      %p128 = scmp.eq.s32.totalorder %s24, 0
      %p129 = por %p127, %p128
      %p130 = scmp.ne.s32.totalorder %s118, %s119
      %p131 = scmp.eq.s32.totalorder %s25, 1
      %p132 = por %p130, %p131
      %p134 = scmp.ne.s32.totalorder %s119, %s133
      %p135 = scmp.eq.s32.totalorder %s25, 0
      %p136 = por %p134, %p135
      %s138 = sadd.s32 %s137, 1
      %p141 = scmp.eq.s32.totalorder %s19, 1
      %p142 = scmp.ne.s32.totalorder %s137, %s139
      %p143 = scmp.eq.s32.totalorder %s19, 0
      %p144 = por %p142, %p143
      %p145 = scmp.ne.s32.totalorder %s137, %s139
      %p146 = scmp.eq.s32.totalorder %s24, 1
      %p147 = por %p145, %p146
      %p148 = scmp.ne.s32.totalorder %s139, %s140
      %p149 = scmp.eq.s32.totalorder %s24, 0
      %p150 = por %p148, %p149
      %p151 = scmp.ne.s32.totalorder %s139, %s140
      %p152 = scmp.eq.s32.totalorder %s25, 1
      %p153 = por %p151, %p152
      %p155 = scmp.ne.s32.totalorder %s140, %s154
      %p156 = scmp.eq.s32.totalorder %s25, 0
      %p157 = por %p155, %p156
      %s159 = sadd.s32 %s158, 1
      %p162 = scmp.eq.s32.totalorder %s19, 1
      %p163 = scmp.ne.s32.totalorder %s158, %s160
      %p164 = scmp.eq.s32.totalorder %s19, 0
      %p165 = por %p163, %p164
      %p166 = scmp.ne.s32.totalorder %s158, %s160
      %p167 = scmp.eq.s32.totalorder %s24, 1
      %p168 = por %p166, %p167
      %p169 = scmp.ne.s32.totalorder %s160, %s161
      %p170 = scmp.eq.s32.totalorder %s24, 0
      %p171 = por %p169, %p170
      %p172 = scmp.ne.s32.totalorder %s160, %s161
      %p173 = scmp.eq.s32.totalorder %s25, 1
      %p174 = por %p172, %p173
      %p176 = scmp.ne.s32.totalorder %s161, %s175
      %p177 = scmp.eq.s32.totalorder %s25, 0
      %p178 = por %p176, %p177
      %s179 = ssub.s32 %s26, %s38
      %s180 = ssub.s32 %s27, %s34
      %s181 = sor.u32 %s179, %s180
      %p182 = scmp.eq.s32.totalorder %s181, 0
      %s184 = sadd.s32 %s183, 1
      %s185 = scalar_select %p182, %s183, %s184
      %p188 = pneg %p182
      %p189 = scmp.eq.s32.totalorder %s19, 1
      %p190 = por %p188, %p189
      %p191 = scmp.ne.s32.totalorder %s183, %s186
      %p192 = scmp.eq.s32.totalorder %s19, 0
      %p193 = por %p191, %p192
      %p194 = scmp.ne.s32.totalorder %s183, %s186
      %p195 = scmp.eq.s32.totalorder %s24, 1
      %p196 = por %p194, %p195
      %p197 = scmp.ne.s32.totalorder %s186, %s187
      %p198 = scmp.eq.s32.totalorder %s24, 0
      %p199 = por %p197, %p198
      %p200 = scmp.ne.s32.totalorder %s186, %s187
      %p201 = scmp.eq.s32.totalorder %s25, 1
      %p202 = por %p200, %p201
      %p204 = scmp.ne.s32.totalorder %s187, %s203
      %p205 = scmp.eq.s32.totalorder %s25, 0
      %p206 = por %p204, %p205
      %p207 = scmp.le.s32.totalorder 1, %s19
      %p208 = scmp.lt.s32.totalorder %s19, 3
      %p209 = pnand %p207, %p208
      %p210 = pneg %p209
      // Predicated region
      $region9: #{tpu_custom_call.1} parent=5 // pred_check
        _
      $region10: #{tpu_custom_call.1} parent=5 // pred_check_branch
        %212 = sbr.rel (%p209) target = $region12
      $region11: #{tpu_custom_call.1} parent=5 // pred_region
        %s213 = ssub.s32 %s19, 1
        // Predicated region
        $region13: #{tpu_custom_call.1} parent=11 // pred_check
          %p214 = pneg %p108
        $region14: #{tpu_custom_call.1} parent=11 // pred_check_branch
          %216 = sbr.rel (%p214) target = $region16
        $region15: #{tpu_custom_call.1} parent=11 // pred_region
          %s218 = ssub.s32 256, 256
          %219 = vsyncadd [#allocation6], %s218
          %s220 = sshll.u32 [#allocation5], 4
          %s221 = int_to_ptr.vmem [resolvable:$true] %s220
          %226 = dma.hbm_to_vmem [thread:$0]  %s2, 256, %s221, [#allocation6], 64, 64, 4
        $region16: #{tpu_custom_call.1} parent=11 // pred_fallthru
          _
        // Predicated region
        $region17: #{tpu_custom_call.1} parent=11 // pred_check
          %p227 = pneg %p129
        $region18: #{tpu_custom_call.1} parent=11 // pred_check_branch
          %229 = sbr.rel (%p227) target = $region20
        $region19: #{tpu_custom_call.1} parent=11 // pred_region
          _
        $region20: #{tpu_custom_call.1} parent=11 // pred_fallthru
          _
        // Predicated region
        $region21: #{tpu_custom_call.1} parent=11 // pred_check
          %p230 = pneg %p150
        $region22: #{tpu_custom_call.1} parent=11 // pred_check_branch
          %232 = sbr.rel (%p230) target = $region24
        $region23: #{tpu_custom_call.1} parent=11 // pred_region
          _
        $region24: #{tpu_custom_call.1} parent=11 // pred_fallthru
          _
        // Predicated region
        $region25: #{tpu_custom_call.1} parent=11 // pred_check
          %p233 = pneg %p171
        $region26: #{tpu_custom_call.1} parent=11 // pred_check_branch
          %235 = sbr.rel (%p233) target = $region28
        $region27: #{tpu_custom_call.1} parent=11 // pred_region
          _
        $region28: #{tpu_custom_call.1} parent=11 // pred_fallthru
          _
      $region12: #{tpu_custom_call.1} parent=5 // pred_fallthru
        _
      %p236 = scmp.lt.s32.totalorder %s19, 2
      // Predicated region
      $region29: #{tpu_custom_call.1} parent=5 // pred_check
        %p237 = pneg %p236
      $region30: #{tpu_custom_call.1} parent=5 // pred_check_branch
        %239 = sbr.rel (%p237) target = $region32
      $region31: #{tpu_custom_call.1} parent=5 // pred_region
        // Predicated region
        $region33: #{tpu_custom_call.1} parent=31 // pred_check
          %p240 = pneg %p53
        $region34: #{tpu_custom_call.1} parent=31 // pred_check_branch
          %242 = sbr.rel (%p240) target = $region36
        $region35: #{tpu_custom_call.1} parent=31 // pred_region
          %s243 = sand.u32 %s43, 1
          %s244 = scalar_lea.sflag [#allocation3], %s243
          %s245 = sand.u32 %s43, 1
          %s246 = smul.addr %s245, 16
          %s247 = scalar_lea.vmem [#allocation2], %s246
          %s249 = ssub.s32 256, 256
          %250 = vsyncadd %s244, %s249
          %s251 = smul.addr %s26, 4
          %s252 = sadd.s32 %s27, %s251
          %s253 = smul.addr %s252, 64
          %s254 = scalar_lea.hbm %s0, %s253
          %s255 = sshll.u32 %s247, 4
          %s256 = int_to_ptr.vmem [resolvable:$true] %s255
          %261 = dma.hbm_to_vmem [thread:$0]  %s254, 256, %s256, %s244, 64, 64, 4
        $region36: #{tpu_custom_call.1} parent=31 // pred_fallthru
          _
        // Predicated region
        $region37: #{tpu_custom_call.1} parent=31 // pred_check
          %p262 = pneg %p81
        $region38: #{tpu_custom_call.1} parent=31 // pred_check_branch
          %264 = sbr.rel (%p262) target = $region40
        $region39: #{tpu_custom_call.1} parent=31 // pred_region
          %p265 = scmp.lt.s32.totalorder %s26, 1
          %s266 = scalar_select %p265, %s26, 1
          %p267 = scmp.lt.s32.totalorder %s27, 0
          %s268 = scalar_select %p267, %s27, 0
          %s269 = smul.addr %s268, 8
          %s270 = smul.addr %s266, 8
          %s271 = sadd.s32 %s269, %s270
          %s272 = smul.addr %s271, 4
          %s273 = scalar_lea.vmem %s1, %s272
        $region40: #{tpu_custom_call.1} parent=31 // pred_fallthru
          _
      $region32: #{tpu_custom_call.1} parent=5 // pred_fallthru
        _
      %p274 = scmp.le.s32.totalorder 1, %s19
      %p275 = scmp.lt.s32.totalorder %s19, 3
      %p276 = pnand %p274, %p275
      %p277 = pneg %p276
      // Predicated region
      $region41: #{tpu_custom_call.1} parent=5 // pred_check
        _
      $region42: #{tpu_custom_call.1} parent=5 // pred_check_branch
        %279 = sbr.rel (%p276) target = $region44
      $region43: #{tpu_custom_call.1} parent=5 // pred_region
        %s280 = ssub.s32 %s19, 1
        %s281 = sand.u32 %s46, 1
        %s282 = scalar_lea.sflag [#allocation3], %s281
        %s283 = sand.u32 %s46, 1
        %s284 = smul.addr %s283, 16
        %s285 = scalar_lea.vmem [#allocation2], %s284
        // Predicated region
        $region45: #{tpu_custom_call.1} parent=43 // pred_check
          %p286 = pneg %p59
        $region46: #{tpu_custom_call.1} parent=43 // pred_check_branch
          %288 = sbr.rel (%p286) target = $region48
        $region47: #{tpu_custom_call.1} parent=43 // pred_region
          %289 = dma.done %s282, 256
        $region48: #{tpu_custom_call.1} parent=43 // pred_fallthru
          _
        // Predicated region
        $region49: #{tpu_custom_call.1} parent=43 // pred_check
          %p290 = pneg %p108
        $region50: #{tpu_custom_call.1} parent=43 // pred_check_branch
          %292 = sbr.rel (%p290) target = $region52
        $region51: #{tpu_custom_call.1} parent=43 // pred_region
          %293 = dma.done [#allocation6], 256
        $region52: #{tpu_custom_call.1} parent=43 // pred_fallthru
          _
        %s294 = sand.u32 %s46, 1
        %s295 = scalar_lea.sflag [#allocation3], %s294
        %s296 = sand.u32 %s46, 1
        %s297 = smul.addr %s296, 16
        %s298 = scalar_lea.vmem [#allocation2], %s297
        %p299 = pneg %p59
        %p300 = pneg %p56
        %p301 = scmp.lt.s32.totalorder %s28, 1
        %s302 = scalar_select %p301, %s28, 1
        %p303 = scmp.lt.s32.totalorder %s29, 0
        %s304 = scalar_select %p303, %s29, 0
        %s305 = smul.addr %s304, 8
        %s306 = smul.addr %s302, 8
        %s307 = sadd.s32 %s305, %s306
        %s308 = smul.addr %s307, 4
        %s309 = scalar_lea.vmem %s1, %s308
        %p310 = pneg %p87
        %p311 = pneg %p84
        %p312 = pneg %p108
        %p313 = pneg %p105
        %p314 = pneg %p129
        %p315 = pneg %p126
        %p316 = pneg %p150
        %p317 = pneg %p147
        %p318 = pneg %p171
        %p319 = pneg %p168
        %p320 = pneg %p199
        %p321 = pneg %p196
        %s322 = sand.u32 %s186, 1
        %s323 = scalar_lea.sflag [#allocation4], %s322
        %s324 = sand.u32 %s186, 1
        %s325 = smul.addr %s324, 32
        %s326 = scalar_lea.vmem [#allocation7], %s325
        %p327 = scmp.lt.s32.totalorder %s28, 1
        %s328 = scalar_select %p327, %s28, 1
        %p329 = scmp.lt.s32.totalorder %s29, 0
        %s330 = scalar_select %p329, %s29, 0
        %s331 = smul.addr %s330, 8
        %s332 = smul.addr %s328, 8
        %s333 = sadd.s32 %s331, %s332
        %s334 = smul.addr %s333, 4
        %s335 = scalar_lea.vmem %s1, %s334
        %v337 = vld [vmem:[%s285] sm:$0xf]
        %v338 = vld [vmem:[%s285 + $0x4] sm:$0xf]
        %v339 = vld [vmem:[%s285 + $0x8] sm:$0xf]
        %v340 = vld [vmem:[%s285 + $0xc] sm:$0xf]
        %v341 = vunpack.c.l.bf16 %v337
        %v342 = vunpack.c.l.bf16 %v338
        %v343 = vunpack.c.l.bf16 %v339
        %v344 = vunpack.c.l.bf16 %v340
        %vm345 = vcmp.gt.f32.partialorder %v341, 0.0
        %vm346 = vcmp.gt.f32.partialorder %v342, 0.0
        %vm347 = vcmp.gt.f32.partialorder %v343, 0.0
        %vm348 = vcmp.gt.f32.partialorder %v344, 0.0
        %v349 = vmul.f32 %v341, 0.2
        %v350 = vmul.f32 %v342, 0.2
        %v351 = vmul.f32 %v343, 0.2
        %v352 = vmul.f32 %v344, 0.2
        %v353 = vsel %vm345, %v341, %v349
        %v354 = vsel %vm346, %v342, %v350
        %v355 = vsel %vm347, %v343, %v351
        %v356 = vsel %vm348, %v344, %v352
        %v357 = vld [vmem:[%s335] sm:$0xf]
        %v358 = vld [vmem:[%s335 + $0x4] sm:$0xf]
        %v359 = vld [vmem:[%s335 + $0x8] sm:$0xf]
        %v360 = vld [vmem:[%s335 + $0xc] sm:$0xf]
        %v361 = vld [vmem:[%s335 + $0x10] sm:$0xf]
        %v362 = vld [vmem:[%s335 + $0x14] sm:$0xf]
        %v363 = vld [vmem:[%s335 + $0x18] sm:$0xf]
        %v364 = vld [vmem:[%s335 + $0x1c] sm:$0xf]
        %v365 = vunpack.c.l.bf16 %v357
        %v366 = vunpack.c.l.bf16 %v358
        %v367 = vunpack.c.l.bf16 %v359
        %v368 = vunpack.c.l.bf16 %v360
        %v369 = vunpack.c.l.bf16 %v361
        %v370 = vunpack.c.l.bf16 %v362
        %v371 = vunpack.c.l.bf16 %v363
        %v372 = vunpack.c.l.bf16 %v364
        %vm373 = vcmp.gt.f32.partialorder %v365, 0.0
        %vm374 = vcmp.gt.f32.partialorder %v366, 0.0
        %vm375 = vcmp.gt.f32.partialorder %v367, 0.0
        %vm376 = vcmp.gt.f32.partialorder %v368, 0.0
        %vm377 = vcmp.gt.f32.partialorder %v369, 0.0
        %vm378 = vcmp.gt.f32.partialorder %v370, 0.0
        %vm379 = vcmp.gt.f32.partialorder %v371, 0.0
        %vm380 = vcmp.gt.f32.partialorder %v372, 0.0
        %v381 = vmul.f32 %v365, 0.2
        %v382 = vmul.f32 %v366, 0.2
        %v383 = vmul.f32 %v367, 0.2
        %v384 = vmul.f32 %v368, 0.2
        %v385 = vmul.f32 %v369, 0.2
        %v386 = vmul.f32 %v370, 0.2
        %v387 = vmul.f32 %v371, 0.2
        %v388 = vmul.f32 %v372, 0.2
        %v389 = vsel %vm373, %v365, %v381
        %v390 = vsel %vm374, %v366, %v382
        %v391 = vsel %vm375, %v367, %v383
        %v392 = vsel %vm376, %v368, %v384
        %v393 = vsel %vm377, %v369, %v385
        %v394 = vsel %vm378, %v370, %v386
        %v395 = vsel %vm379, %v371, %v387
        %v396 = vsel %vm380, %v372, %v388
        %v397 = vlaneseq
        %v398 = vand.u32 %v397, 127
        %399 = vrot.lane.b32.xlu0 %v353, 3
        %v400 = vpop.permute.xlu0 %399
        %401 = vrot.lane.b32.xlu0 %v354, 3
        %v402 = vpop.permute.xlu0 %401
        %403 = vrot.lane.b32.xlu0 %v355, 3
        %v404 = vpop.permute.xlu0 %403
        %405 = vrot.lane.b32.xlu0 %v356, 3
        %v406 = vpop.permute.xlu0 %405
        %vm407 = vcmp.lt.s32.totalorder %v398, 3
        %v408 = vsel %vm407, %v389, %v400
        %v409 = vsel %vm407, %v390, %v402
        %v410 = vsel %vm407, %v391, %v404
        %v411 = vsel %vm407, %v392, %v406
        %v412 = vpack.c.bf16 %v409, %v408
        %v413 = vpack.c.bf16 %v411, %v410
        %414 = vrot.lane.b32.xlu0 %v353, 125
        %v415 = vpop.permute.xlu0 %414
        %416 = vrot.lane.b32.xlu0 %v354, 125
        %v417 = vpop.permute.xlu0 %416
        %418 = vrot.lane.b32.xlu0 %v355, 125
        %v419 = vpop.permute.xlu0 %418
        %420 = vrot.lane.b32.xlu0 %v356, 125
        %v421 = vpop.permute.xlu0 %420
        %vm422 = vcmp.ge.s32.totalorder %v398, 125
        %v423 = vsel %vm422, %v393, %v415
        %v424 = vsel %vm422, %v394, %v417
        %v425 = vsel %vm422, %v395, %v419
        %v426 = vsel %vm422, %v396, %v421
        %v427 = vpack.c.bf16 %v424, %v423
        %v428 = vpack.c.bf16 %v426, %v425
        %v429 = vpack.c.bf16 %v354, %v353
        %v430 = vpack.c.bf16 %v356, %v355
        %v431 = vld [vmem:[#allocation5] sm:$0xf]
        %v432 = vld [vmem:[#allocation5 + $0x4] sm:$0xf]
        %v433 = vld [vmem:[#allocation5 + $0x8] sm:$0xf]
        %v434 = vld [vmem:[#allocation5 + $0xc] sm:$0xf]
        %v435 = vld [vmem:[%s3] sm:$0xff]
        %v436 = vld [vmem:[%s3 + $0x8] sm:$0xff]
        %v437 = vld [vmem:[%s3 + $0x10] sm:$0xff]
        %v438 = vld [vmem:[%s3 + $0x18] sm:$0xff]
        %440 = vset.pattern.permute.xlu0 0
        %441 = vperm.xlu0 %440, %v435
        %v442 = vpop.permute.xlu0 %441
        %445 = vset.pattern.permute.xlu0 0
        %446 = vperm.xlu0 %445, %v436
        %v447 = vpop.permute.xlu0 %446
        %450 = vset.pattern.permute.xlu0 0
        %451 = vperm.xlu0 %450, %v437
        %v452 = vpop.permute.xlu0 %451
        %455 = vset.pattern.permute.xlu0 0
        %456 = vperm.xlu0 %455, %v438
        %v457 = vpop.permute.xlu0 %456
        %v463 = vunpack.c.l.b16 %v431
        %v464 = vunpack.c.l.b16 %v432
        %v465 = vunpack.c.l.b16 %v433
        %v466 = vunpack.c.l.b16 %v434
        %v467 = vpack.c.b16 %v464, %v463
        %v468 = vpack.c.b16 %v466, %v465
        %vm469 = vcmask 785408
        %v471 = vsel %vm469, %v467, 0
        %v474 = vsel %vm469, %v468, 0
        %476 = vmatprep.subr.bf16.mxu0 0
        %477 = vmatpush1.bf16.msra.mxu0 %v412
        %478 = vmatprep.subr.bf16.mxu0 0
        %479 = vmatpush1.bf16.msra.mxu0 %v413
        %480 = vmatprep.subr.bf16.mxu0 0
        %481 = vmatpush1.bf16.msra.mxu0 %v429
        %482 = vmatprep.subr.bf16.mxu0 0
        %483 = vmatpush1.bf16.msra.mxu0 %v430
        %484 = vmatprep.subr.bf16.mxu0 0
        %485 = vmatpush1.bf16.msra.mxu0 %v427
        %486 = vmatprep.subr.bf16.mxu0 0
        %487 = vmatpush1.bf16.msra.mxu0 %v428
        %488 = vmatprep.subr.bf16.mxu0 0
        %489 = vmatpush1.bf16.msra.mxu0 0
        %490 = vmatprep.subr.bf16.mxu0 0
        %491 = vmatpush1.bf16.msra.mxu0 0
        %492 = vmatprep.subr.bf16.mxu0 0
        %493 = vmatpush1.bf16.msra.mxu0 0
        %494 = vmatprep.subr.bf16.mxu0 0
        %495 = vmatpush1.bf16.msra.mxu0 0
        %496 = vmatprep.subr.bf16.mxu0 0
        %497 = vmatpush1.bf16.msra.mxu0 0
        %498 = vmatprep.subr.bf16.mxu0 0
        %499 = vmatpush1.bf16.msra.mxu0 0
        %500 = vmatprep.subr.bf16.mxu0 0
        %501 = vmatpush1.bf16.msra.mxu0 0
        %502 = vmatprep.subr.bf16.mxu0 0
        %503 = vmatpush1.bf16.msra.mxu0 0
        %504 = vmatprep.subr.bf16.mxu0 0
        %505 = vmatpush1.bf16.msra.mxu0 0
        %506 = vmatprep.subr.bf16.mxu0 0
        %507 = vmatpush1.bf16.msra.mxu0 0
        %508 = vmatprep.mubr.bf16.mxu0 0
        %509 = vmatmul.mubr.bf16.gmra.mrb[0].mxu0 %v471
        %v510 = vpop.f32.mrb[0].mxu0
        %v511 = vadd.f32 %v442, %v510
        %v512 = vpop.f32.mrb[0].mxu0
        %v513 = vpop.f32.mrb[0].mxu0
        %v514 = vadd.f32 %v447, %v513
        %v515 = vpop.f32.mrb[0].mxu0
        %516 = vmatprep.mubr.bf16.mxu0 0
        %517 = vmatmul.mubr.bf16.gmra.mrb[0].mxu0 %v474
        %v518 = vpop.f32.mrb[0].mxu0
        %v519 = vadd.f32 %v452, %v518
        %v520 = vpop.f32.mrb[0].mxu0
        %v521 = vpop.f32.mrb[0].mxu0
        %v522 = vadd.f32 %v457, %v521
        %v523 = vpop.f32.mrb[0].mxu0
        %524 = vdwg.mxu0
        %vm525 = vcmp.gt.f32.partialorder %v511, 0.0
        %vm526 = vcmp.gt.f32.partialorder %v514, 0.0
        %vm527 = vcmp.gt.f32.partialorder %v519, 0.0
        %vm528 = vcmp.gt.f32.partialorder %v522, 0.0
        %v529 = vmul.f32 %v511, 0.2
        %v530 = vmul.f32 %v514, 0.2
        %v531 = vmul.f32 %v519, 0.2
        %v532 = vmul.f32 %v522, 0.2
        %v533 = vsel %vm525, %v511, %v529
        %v534 = vsel %vm526, %v514, %v530
        %v535 = vsel %vm527, %v519, %v531
        %v536 = vsel %vm528, %v522, %v532
        %v537 = vpack.c.bf16 %v534, %v533
        %v538 = vpack.c.bf16 %v536, %v535
        %v543 = vunpack.c.l.b16 %v337
        %v544 = vunpack.c.l.b16 %v338
        %v545 = vunpack.c.l.b16 %v339
        %v546 = vunpack.c.l.b16 %v340
        %v547 = vpack.c.b16 %v544, %v543
        %v548 = vpack.c.b16 %v546, %v545
        %v551 = vld [vmem:[%s4] sm:$0xf]
        %v552 = vld [vmem:[%s4 + $0x4] sm:$0xf]
        %v553 = vld [vmem:[%s4 + $0x8] sm:$0xf]
        %v554 = vld [vmem:[%s4 + $0xc] sm:$0xf]
        %v555 = vld [vmem:[%s5] sm:$0xff]
        %v556 = vld [vmem:[%s5 + $0x8] sm:$0xff]
        %v557 = vld [vmem:[%s5 + $0x10] sm:$0xff]
        %v558 = vld [vmem:[%s5 + $0x18] sm:$0xff]
        %560 = vset.pattern.permute.xlu0 0
        %561 = vperm.xlu0 %560, %v555
        %v562 = vpop.permute.xlu0 %561
        %565 = vset.pattern.permute.xlu0 0
        %566 = vperm.xlu0 %565, %v556
        %v567 = vpop.permute.xlu0 %566
        %570 = vset.pattern.permute.xlu0 0
        %571 = vperm.xlu0 %570, %v557
        %v572 = vpop.permute.xlu0 %571
        %575 = vset.pattern.permute.xlu0 0
        %576 = vperm.xlu0 %575, %v558
        %v577 = vpop.permute.xlu0 %576
        %v583 = vunpack.c.l.b16 %v551
        %v584 = vunpack.c.l.b16 %v552
        %v585 = vunpack.c.l.b16 %v553
        %v586 = vunpack.c.l.b16 %v554
        %v587 = vpack.c.b16 %v584, %v583
        %v588 = vpack.c.b16 %v586, %v585
        %vm589 = vcmask 523264
        %v591 = vsel %vm589, %v587, 0
        %v594 = vsel %vm589, %v588, 0
        %596 = vmatprep.subr.bf16.mxu0 0
        %597 = vmatpush1.bf16.msra.mxu0 %v547
        %598 = vmatprep.subr.bf16.mxu0 0
        %599 = vmatpush1.bf16.msra.mxu0 %v548
        %600 = vmatprep.subr.bf16.mxu0 0
        %601 = vmatpush1.bf16.msra.mxu0 %v537
        %602 = vmatprep.subr.bf16.mxu0 0
        %603 = vmatpush1.bf16.msra.mxu0 %v538
        %604 = vmatprep.subr.bf16.mxu0 0
        %605 = vmatpush1.bf16.msra.mxu0 0
        %606 = vmatprep.subr.bf16.mxu0 0
        %607 = vmatpush1.bf16.msra.mxu0 0
        %608 = vmatprep.subr.bf16.mxu0 0
        %609 = vmatpush1.bf16.msra.mxu0 0
        %610 = vmatprep.subr.bf16.mxu0 0
        %611 = vmatpush1.bf16.msra.mxu0 0
        %612 = vmatprep.subr.bf16.mxu0 0
        %613 = vmatpush1.bf16.msra.mxu0 0
        %614 = vmatprep.subr.bf16.mxu0 0
        %615 = vmatpush1.bf16.msra.mxu0 0
        %616 = vmatprep.subr.bf16.mxu0 0
        %617 = vmatpush1.bf16.msra.mxu0 0
        %618 = vmatprep.subr.bf16.mxu0 0
        %619 = vmatpush1.bf16.msra.mxu0 0
        %620 = vmatprep.subr.bf16.mxu0 0
        %621 = vmatpush1.bf16.msra.mxu0 0
        %622 = vmatprep.subr.bf16.mxu0 0
        %623 = vmatpush1.bf16.msra.mxu0 0
        %624 = vmatprep.subr.bf16.mxu0 0
        %625 = vmatpush1.bf16.msra.mxu0 0
        %626 = vmatprep.subr.bf16.mxu0 0
        %627 = vmatpush1.bf16.msra.mxu0 0
        %628 = vmatprep.mubr.bf16.mxu0 0
        %629 = vmatmul.mubr.bf16.gmra.mrb[0].mxu0 %v591
        %v630 = vpop.f32.mrb[0].mxu0
        %v631 = vadd.f32 %v562, %v630
        %v632 = vpop.f32.mrb[0].mxu0
        %v633 = vpop.f32.mrb[0].mxu0
        %v634 = vadd.f32 %v567, %v633
        %v635 = vpop.f32.mrb[0].mxu0
        %636 = vmatprep.mubr.bf16.mxu0 0
        %637 = vmatmul.mubr.bf16.gmra.mrb[0].mxu0 %v594
        %v638 = vpop.f32.mrb[0].mxu0
        %v639 = vadd.f32 %v572, %v638
        %v640 = vpop.f32.mrb[0].mxu0
        %v641 = vpop.f32.mrb[0].mxu0
        %v642 = vadd.f32 %v577, %v641
        %v643 = vpop.f32.mrb[0].mxu0
        %644 = vdwg.mxu0
        %645 = vst [vmem:[%s326] sm:$0xff] %v631
        %646 = vst [vmem:[%s326 + $0x8] sm:$0xff] %v634
        %647 = vst [vmem:[%s326 + $0x10] sm:$0xff] %v639
        %648 = vst [vmem:[%s326 + $0x18] sm:$0xff] %v642
        %s649 = sand.u32 %s186, 1
        %s650 = scalar_lea.sflag [#allocation4], %s649
        %s651 = sand.u32 %s186, 1
        %s652 = smul.addr %s651, 32
        %s653 = scalar_lea.vmem [#allocation7], %s652
        // Predicated region
        $region53: #{tpu_custom_call.1} parent=43 // pred_check
          %p654 = pneg %p196
        $region54: #{tpu_custom_call.1} parent=43 // pred_check_branch
          %656 = sbr.rel (%p654) target = $region56
        $region55: #{tpu_custom_call.1} parent=43 // pred_region
          %s658 = ssub.s32 512, 512
          %659 = vsyncadd %s650, %s658
          %s660 = smul.addr %s28, 4
          %s661 = sadd.s32 %s29, %s660
          %s662 = smul.addr %s661, 128
          %s663 = scalar_lea.hbm %s6, %s662
          %s664 = sshll.u32 %s653, 4
          %s665 = int_to_ptr.vmem [resolvable:$true] %s664
          %670 = dma.vmem_to_hbm [thread:$0]  %s665, 512, %s663, %s650, 128, 128, 8
        $region56: #{tpu_custom_call.1} parent=43 // pred_fallthru
          _
      $region44: #{tpu_custom_call.1} parent=5 // pred_fallthru
        _
      %p671 = scmp.le.s32.totalorder 2, %s19
      // Predicated region
      $region57: #{tpu_custom_call.1} parent=5 // pred_check
        %p672 = pneg %p671
      $region58: #{tpu_custom_call.1} parent=5 // pred_check_branch
        %674 = sbr.rel (%p672) target = $region60
      $region59: #{tpu_custom_call.1} parent=5 // pred_region
        %s675 = ssub.s32 %s19, 2
        // Predicated region
        $region61: #{tpu_custom_call.1} parent=59 // pred_check
          %p676 = pneg %p202
        $region62: #{tpu_custom_call.1} parent=59 // pred_check_branch
          %678 = sbr.rel (%p676) target = $region64
        $region63: #{tpu_custom_call.1} parent=59 // pred_region
          %s679 = sand.u32 %s187, 1
          %s680 = scalar_lea.sflag [#allocation4], %s679
          %s681 = sand.u32 %s187, 1
          %s682 = smul.addr %s681, 32
          %s683 = scalar_lea.vmem [#allocation7], %s682
          %684 = dma.done %s680, 512
        $region64: #{tpu_custom_call.1} parent=59 // pred_fallthru
          _
      $region60: #{tpu_custom_call.1} parent=5 // pred_fallthru
        _
    $region6: #{tpu_custom_call.1} parent=1 // loop_footer
      %s23 = sadd.s32 1, %s19
    $region7: #{tpu_custom_call.1} parent=1 // loop_footer_branch
      %18 = sbr.rel target = $region3
    $region8: #{tpu_custom_call.1} parent=1 // loop_exit
      _
    %685 = vsyncpa [#allocation3], 1
    %s686 = scalar_lea.sflag [#allocation3], 1
    %687 = vsyncpa %s686, 1
    %688 = vsyncpa [#allocation6], 1
    %689 = vsyncpa [#allocation4], 1
    %s690 = scalar_lea.sflag [#allocation4], 1
    %691 = vsyncpa %s690, 1

</llo_original>
